<compile_context>
chip_gen: v6e
topology: v6e:2x2x1
jax: 0.10.0
libtpu: 0.0.40
codegen_flags: <defaults>
</compile_context>

<pallas_src>
import functools

import jax
import jax.numpy as jnp
from jax.experimental import pallas as pl
from jax.experimental.pallas import tpu as pltpu

# ---- synthetic (small) sizes consistent with the module's forward ----------
BATCH = 2
SEQ = 8
PRE_DIM = 64      # stand-in for pre_model.config.hidden_size  (gpt2: 768)
NET_DIM = 128     # stand-in for bittensor.__network_dim__     (1024)
VOCAB = 256       # stand-in for bittensor.__vocab_size__      (50258)
LOSS_LANES = 128  # lane-dense scalar-loss output row (avoids masked vst.msk)


# -----------------------------------------------------------------------------
# Fused Pallas kernel
# -----------------------------------------------------------------------------
def _fused_server_kernel(ids_ref,            # SMEM (N,) int32 token ids (scalar prefetch)
                         emb_ref,            # VMEM (VOCAB, PRE_DIM) bf16
                         w_h_ref,            # VMEM (PRE_DIM, PRE_DIM) bf16
                         b_h_ref,            # VMEM (1, PRE_DIM) f32
                         w_dec_ref,          # VMEM (PRE_DIM, VOCAB) bf16 (sliced rows)
                         logits_ref,         # VMEM (N, VOCAB) f32 out
                         loss_ref,           # VMEM (1, LOSS_LANES) f32 out
                         *, seq):
    n, vocab = logits_ref.shape

    # ---- materialize token-id / shifted-label columns from SMEM scalars -----
    # N is tiny and static -> fully unrolled scalar reads + selects.
    rowi = jax.lax.broadcasted_iota(jnp.int32, (n, 1), 0)
    ids_col = jnp.zeros((n, 1), jnp.int32)
    lab_col = jnp.full((n, 1), -1, jnp.int32)      # -1 == "row has no label" (masked)
    for i in range(n):
        tok = ids_ref[i]
        ids_col = jnp.where(rowi == i, tok, ids_col)
        if i % seq != 0:                           # token i labels row i-1 (same sentence)
            lab_col = jnp.where(rowi == i - 1, tok, lab_col)

    lane = jax.lax.broadcasted_iota(jnp.int32, (n, vocab), 1)

    # ---- embedding gather as a one-hot MXU matmul (fused, no XLA gather) ----
    # TODO(synk): at gpt2 scale stream embedding rows via scalar-prefetch
    #             pl.Element row index_map instead of a one-hot matmul.
    onehot = (lane == ids_col).astype(jnp.bfloat16)                       # (N, VOCAB)
    x = jnp.dot(onehot, emb_ref[...], preferred_element_type=jnp.float32)  # (N, PRE_DIM)

    # ---- stand-in pre_model block: tanh(x @ w_h + b_h) ----------------------
    h = jnp.tanh(jnp.dot(x.astype(jnp.bfloat16), w_h_ref[...],
                         preferred_element_type=jnp.float32) + b_h_ref[...])

    # ---- decoder (F.pad folded into the row-sliced decoder weight) ----------
    logits = jnp.dot(h.astype(jnp.bfloat16), w_dec_ref[...],
                     preferred_element_type=jnp.float32)                  # (N, VOCAB) f32
    logits_ref[...] = logits

    # ---- shifted-token cross entropy, fully in-kernel, masked mean ----------
    # TODO(synk): at real vocab (~50k) switch to an online logsumexp over vocab
    #             tiles (offset labels per tile) instead of one full-vocab block.
    m = jnp.max(logits, axis=-1, keepdims=True)
    lse = m + jnp.log(jnp.sum(jnp.exp(logits - m), axis=-1, keepdims=True))   # (N, 1)
    lab_oh = lane == lab_col                        # all-False on masked rows (label == -1)
    lab_logit = jnp.sum(jnp.where(lab_oh, logits, 0.0), axis=-1, keepdims=True)
    valid = jnp.sum(lab_oh.astype(jnp.float32), axis=-1, keepdims=True)       # 1.0 / 0.0
    n_valid = n - n // seq                          # B * (S - 1), static
    loss11 = jnp.sum(valid * (lse - lab_logit), axis=0, keepdims=True) * (1.0 / n_valid)
    loss_ref[...] = jnp.broadcast_to(loss11, loss_ref.shape)


def fused_server_forward(ids_flat, emb, w_h, b_h, w_dec_eff, *, seq):
    """ids_flat: (N,) int32.  Returns (logits [N, VOCAB] f32, loss_row [1,128] f32)."""
    n = ids_flat.shape[0]
    vocab = w_dec_eff.shape[1]

    grid_spec = pltpu.PrefetchScalarGridSpec(
        num_scalar_prefetch=1,                      # token ids -> SMEM scalar path
        grid=(1,),                                  # everything fits in one VMEM step
        in_specs=[
            pl.BlockSpec(emb.shape, lambda i, ids: (0, 0)),
            pl.BlockSpec(w_h.shape, lambda i, ids: (0, 0)),
            pl.BlockSpec(b_h.shape, lambda i, ids: (0, 0)),
            pl.BlockSpec(w_dec_eff.shape, lambda i, ids: (0, 0)),
        ],
        out_specs=[
            pl.BlockSpec((n, vocab), lambda i, ids: (0, 0)),
            pl.BlockSpec((1, LOSS_LANES), lambda i, ids: (0, 0)),
        ],
    )
    return pl.pallas_call(
        functools.partial(_fused_server_kernel, seq=seq),
        grid_spec=grid_spec,
        out_shape=(jax.ShapeDtypeStruct((n, vocab), jnp.float32),
                   jax.ShapeDtypeStruct((1, LOSS_LANES), jnp.float32)),
        compiler_params=pltpu.CompilerParams(
            dimension_semantics=("arbitrary",)),
    )(ids_flat, emb, w_h, b_h, w_dec_eff)


# -----------------------------------------------------------------------------
# Parameters & forward pass (mirrors server.forward / server.encode_forward)
# -----------------------------------------------------------------------------
def init_params(key):
    k_emb, k_wh, k_dec = jax.random.split(key, 3)
    # Weights stored bf16 (MXU-native on v6e/v7x, halves weight streaming traffic).
    emb = (0.02 * jax.random.normal(k_emb, (VOCAB, PRE_DIM), jnp.float32)).astype(jnp.bfloat16)
    w_h = (jax.random.normal(k_wh, (PRE_DIM, PRE_DIM), jnp.float32)
           / (PRE_DIM ** 0.5)).astype(jnp.bfloat16)
    b_h = jnp.zeros((1, PRE_DIM), jnp.float32)
    # torch.nn.Linear(final_dim, vocab, bias=False) stores weight [vocab, final_dim];
    # kept pre-transposed as [final_dim, vocab] for row-major matmul.
    w_dec = (jax.random.normal(k_dec, (NET_DIM, VOCAB), jnp.float32)
             / (NET_DIM ** 0.5)).astype(jnp.bfloat16)
    return {"emb": emb, "w_h": w_h, "b_h": b_h, "w_dec": w_dec}


@jax.jit
def server_forward(params, inputs):
    """inputs: [B, S] int32 token ids. Returns (loss, decoded_targets)."""
    b, s = inputs.shape

    # TODO(synk): token_remap is a tokenizer decode/re-encode round trip — no
    #             numeric equivalent; treated as identity on token ids.
    ids_flat = inputs.reshape(b * s).astype(jnp.int32)

    # interpolate=True but sen_len == pre_hidden seq len -> branch not taken.
    # padding=True path: F.pad(down, (pad_l, pad_r)) @ w_dec
    #                  == down @ w_dec[pad_l : pad_l + PRE_DIM, :]   (exact)
    pad_l = (NET_DIM - PRE_DIM) // 2
    w_dec_eff = jax.lax.slice_in_dim(params["w_dec"], pad_l, pad_l + PRE_DIM, axis=0)

    logits, loss_row = fused_server_forward(
        ids_flat, params["emb"], params["w_h"], params["b_h"], w_dec_eff, seq=s)

    decoded_targets = logits.reshape(b, s, VOCAB)       # [B, S, V] f32
    loss = loss_row[0, 0]                               # scalar (mean reduction)
    return loss, decoded_targets


# Pure-JAX reference of the original (pad-based) formulation, for a sanity check.
def _reference_forward(params, inputs):
    b, s = inputs.shape
    x = jnp.take(params["emb"], inputs.reshape(-1), axis=0)                    # bf16
    h = jnp.tanh(jnp.dot(x, params["w_h"],
                         preferred_element_type=jnp.float32) + params["b_h"])
    pad_l = (NET_DIM - PRE_DIM) // 2
    pad_r = NET_DIM - PRE_DIM - pad_l
    enc = jnp.pad(h.astype(jnp.bfloat16), ((0, 0), (pad_l, pad_r)))
    logits = jnp.dot(enc, params["w_dec"],
                     preferred_element_type=jnp.float32).reshape(b, s, VOCAB)
    shift_logits = logits[:, :-1, :].reshape(-1, VOCAB)
    shift_labels = inputs[:, 1:].reshape(-1)
    lse = jax.nn.logsumexp(shift_logits, axis=-1)
    lab = jnp.take_along_axis(shift_logits, shift_labels[:, None], axis=-1)[:, 0]
    return jnp.mean(lse - lab), logits


# -----------------------------------------------------------------------------
if __name__ == "__main__":
    key = jax.random.PRNGKey(0)
    k_param, k_tok = jax.random.split(key)
    params = init_params(k_param)
    inputs = jax.random.randint(k_tok, (BATCH, SEQ), 0, VOCAB, dtype=jnp.int32)

    loss, decoded_targets = server_forward(params, inputs)
    jax.block_until_ready((loss, decoded_targets))

    assert decoded_targets.shape == (BATCH, SEQ, VOCAB)
    assert loss.shape == () and bool(jnp.isfinite(loss))

    ref_loss, ref_logits = _reference_forward(params, inputs)
    assert bool(jnp.allclose(decoded_targets, ref_logits, rtol=1e-2, atol=1e-2))
    assert bool(jnp.allclose(loss, ref_loss, rtol=1e-2, atol=1e-2))

    print("KERNEL_OK")
</pallas_src>

<mosaic_0001>
module attributes {stable_mosaic.version = 11 : i64} {
  func.func @_fused_server_kernel(%arg0: i32, %arg1: memref<16xi32, #tpu.memory_space<smem>>, %arg2: memref<256x64xbf16, #tpu.memory_space<vmem>>, %arg3: memref<64x64xbf16, #tpu.memory_space<vmem>>, %arg4: memref<1x64xf32, #tpu.memory_space<vmem>>, %arg5: memref<64x256xbf16, #tpu.memory_space<vmem>>, %arg6: memref<16x256xf32, #tpu.memory_space<vmem>>, %arg7: memref<1x128xf32, #tpu.memory_space<vmem>>) attributes {dimension_semantics = [#tpu.dimension_semantics<arbitrary>], iteration_bounds = array<i64: 1>, scalar_prefetch = 1 : i64, scratch_operands = 0 : i64, tpu.core_type = #tpu.core_type<tc>, window_params = [{pipeline_mode = #tpu.pipeline_mode<synchronous>, transform_indices = @transform_0, window_bounds = array<i64: 256, 64>}, {pipeline_mode = #tpu.pipeline_mode<synchronous>, transform_indices = @transform_1, window_bounds = array<i64: 64, 64>}, {pipeline_mode = #tpu.pipeline_mode<synchronous>, transform_indices = @transform_2, window_bounds = array<i64: 1, 64>}, {pipeline_mode = #tpu.pipeline_mode<synchronous>, transform_indices = @transform_3, window_bounds = array<i64: 64, 256>}, {pipeline_mode = #tpu.pipeline_mode<synchronous>, transform_indices = @transform_4, window_bounds = array<i64: 16, 256>}, {pipeline_mode = #tpu.pipeline_mode<synchronous>, transform_indices = @transform_5, window_bounds = array<i64: 1, 128>}]} {
    %0 = tpu.iota {dimensions = array<i32: 0>} : vector<16x1xi32>
    %c0_i32 = arith.constant 0 : i32
    %1 = vector.broadcast %c0_i32 : i32 to vector<16x1xi32>
    %c-1_i32 = arith.constant -1 : i32
    %2 = vector.broadcast %c-1_i32 : i32 to vector<16x1xi32>
    %c0 = arith.constant 0 : index
    %3 = memref.load %arg1[%c0] : memref<16xi32, #tpu.memory_space<smem>>
    %c0_i32_0 = arith.constant 0 : i32
    %4 = vector.broadcast %c0_i32_0 : i32 to vector<16x1xi32>
    %5 = arith.cmpi eq, %0, %4 : vector<16x1xi32>
    %6 = vector.broadcast %3 : i32 to vector<16x1xi32>
    %7 = arith.select %5, %6, %1 : vector<16x1xi1>, vector<16x1xi32>
    %c1 = arith.constant 1 : index
    %8 = memref.load %arg1[%c1] : memref<16xi32, #tpu.memory_space<smem>>
    %c1_i32 = arith.constant 1 : i32
    %9 = vector.broadcast %c1_i32 : i32 to vector<16x1xi32>
    %10 = arith.cmpi eq, %0, %9 : vector<16x1xi32>
    %11 = vector.broadcast %8 : i32 to vector<16x1xi32>
    %12 = arith.select %10, %11, %7 : vector<16x1xi1>, vector<16x1xi32>
    %c0_i32_1 = arith.constant 0 : i32
    %13 = vector.broadcast %c0_i32_1 : i32 to vector<16x1xi32>
    %14 = arith.cmpi eq, %0, %13 : vector<16x1xi32>
    %15 = vector.broadcast %8 : i32 to vector<16x1xi32>
    %16 = arith.select %14, %15, %2 : vector<16x1xi1>, vector<16x1xi32>
    %c2 = arith.constant 2 : index
    %17 = memref.load %arg1[%c2] : memref<16xi32, #tpu.memory_space<smem>>
    %c2_i32 = arith.constant 2 : i32
    %18 = vector.broadcast %c2_i32 : i32 to vector<16x1xi32>
    %19 = arith.cmpi eq, %0, %18 : vector<16x1xi32>
    %20 = vector.broadcast %17 : i32 to vector<16x1xi32>
    %21 = arith.select %19, %20, %12 : vector<16x1xi1>, vector<16x1xi32>
    %c1_i32_2 = arith.constant 1 : i32
    %22 = vector.broadcast %c1_i32_2 : i32 to vector<16x1xi32>
    %23 = arith.cmpi eq, %0, %22 : vector<16x1xi32>
    %24 = vector.broadcast %17 : i32 to vector<16x1xi32>
    %25 = arith.select %23, %24, %16 : vector<16x1xi1>, vector<16x1xi32>
    %c3 = arith.constant 3 : index
    %26 = memref.load %arg1[%c3] : memref<16xi32, #tpu.memory_space<smem>>
    %c3_i32 = arith.constant 3 : i32
    %27 = vector.broadcast %c3_i32 : i32 to vector<16x1xi32>
    %28 = arith.cmpi eq, %0, %27 : vector<16x1xi32>
    %29 = vector.broadcast %26 : i32 to vector<16x1xi32>
    %30 = arith.select %28, %29, %21 : vector<16x1xi1>, vector<16x1xi32>
    %c2_i32_3 = arith.constant 2 : i32
    %31 = vector.broadcast %c2_i32_3 : i32 to vector<16x1xi32>
    %32 = arith.cmpi eq, %0, %31 : vector<16x1xi32>
    %33 = vector.broadcast %26 : i32 to vector<16x1xi32>
    %34 = arith.select %32, %33, %25 : vector<16x1xi1>, vector<16x1xi32>
    %c4 = arith.constant 4 : index
    %35 = memref.load %arg1[%c4] : memref<16xi32, #tpu.memory_space<smem>>
    %c4_i32 = arith.constant 4 : i32
    %36 = vector.broadcast %c4_i32 : i32 to vector<16x1xi32>
    %37 = arith.cmpi eq, %0, %36 : vector<16x1xi32>
    %38 = vector.broadcast %35 : i32 to vector<16x1xi32>
    %39 = arith.select %37, %38, %30 : vector<16x1xi1>, vector<16x1xi32>
    %c3_i32_4 = arith.constant 3 : i32
    %40 = vector.broadcast %c3_i32_4 : i32 to vector<16x1xi32>
    %41 = arith.cmpi eq, %0, %40 : vector<16x1xi32>
    %42 = vector.broadcast %35 : i32 to vector<16x1xi32>
    %43 = arith.select %41, %42, %34 : vector<16x1xi1>, vector<16x1xi32>
    %c5 = arith.constant 5 : index
    %44 = memref.load %arg1[%c5] : memref<16xi32, #tpu.memory_space<smem>>
    %c5_i32 = arith.constant 5 : i32
    %45 = vector.broadcast %c5_i32 : i32 to vector<16x1xi32>
    %46 = arith.cmpi eq, %0, %45 : vector<16x1xi32>
    %47 = vector.broadcast %44 : i32 to vector<16x1xi32>
    %48 = arith.select %46, %47, %39 : vector<16x1xi1>, vector<16x1xi32>
    %c4_i32_5 = arith.constant 4 : i32
    %49 = vector.broadcast %c4_i32_5 : i32 to vector<16x1xi32>
    %50 = arith.cmpi eq, %0, %49 : vector<16x1xi32>
    %51 = vector.broadcast %44 : i32 to vector<16x1xi32>
    %52 = arith.select %50, %51, %43 : vector<16x1xi1>, vector<16x1xi32>
    %c6 = arith.constant 6 : index
    %53 = memref.load %arg1[%c6] : memref<16xi32, #tpu.memory_space<smem>>
    %c6_i32 = arith.constant 6 : i32
    %54 = vector.broadcast %c6_i32 : i32 to vector<16x1xi32>
    %55 = arith.cmpi eq, %0, %54 : vector<16x1xi32>
    %56 = vector.broadcast %53 : i32 to vector<16x1xi32>
    %57 = arith.select %55, %56, %48 : vector<16x1xi1>, vector<16x1xi32>
    %c5_i32_6 = arith.constant 5 : i32
    %58 = vector.broadcast %c5_i32_6 : i32 to vector<16x1xi32>
    %59 = arith.cmpi eq, %0, %58 : vector<16x1xi32>
    %60 = vector.broadcast %53 : i32 to vector<16x1xi32>
    %61 = arith.select %59, %60, %52 : vector<16x1xi1>, vector<16x1xi32>
    %c7 = arith.constant 7 : index
    %62 = memref.load %arg1[%c7] : memref<16xi32, #tpu.memory_space<smem>>
    %c7_i32 = arith.constant 7 : i32
    %63 = vector.broadcast %c7_i32 : i32 to vector<16x1xi32>
    %64 = arith.cmpi eq, %0, %63 : vector<16x1xi32>
    %65 = vector.broadcast %62 : i32 to vector<16x1xi32>
    %66 = arith.select %64, %65, %57 : vector<16x1xi1>, vector<16x1xi32>
    %c6_i32_7 = arith.constant 6 : i32
    %67 = vector.broadcast %c6_i32_7 : i32 to vector<16x1xi32>
    %68 = arith.cmpi eq, %0, %67 : vector<16x1xi32>
    %69 = vector.broadcast %62 : i32 to vector<16x1xi32>
    %70 = arith.select %68, %69, %61 : vector<16x1xi1>, vector<16x1xi32>
    %c8 = arith.constant 8 : index
    %71 = memref.load %arg1[%c8] : memref<16xi32, #tpu.memory_space<smem>>
    %c8_i32 = arith.constant 8 : i32
    %72 = vector.broadcast %c8_i32 : i32 to vector<16x1xi32>
    %73 = arith.cmpi eq, %0, %72 : vector<16x1xi32>
    %74 = vector.broadcast %71 : i32 to vector<16x1xi32>
    %75 = arith.select %73, %74, %66 : vector<16x1xi1>, vector<16x1xi32>
    %c9 = arith.constant 9 : index
    %76 = memref.load %arg1[%c9] : memref<16xi32, #tpu.memory_space<smem>>
    %c9_i32 = arith.constant 9 : i32
    %77 = vector.broadcast %c9_i32 : i32 to vector<16x1xi32>
    %78 = arith.cmpi eq, %0, %77 : vector<16x1xi32>
    %79 = vector.broadcast %76 : i32 to vector<16x1xi32>
    %80 = arith.select %78, %79, %75 : vector<16x1xi1>, vector<16x1xi32>
    %c8_i32_8 = arith.constant 8 : i32
    %81 = vector.broadcast %c8_i32_8 : i32 to vector<16x1xi32>
    %82 = arith.cmpi eq, %0, %81 : vector<16x1xi32>
    %83 = vector.broadcast %76 : i32 to vector<16x1xi32>
    %84 = arith.select %82, %83, %70 : vector<16x1xi1>, vector<16x1xi32>
    %c10 = arith.constant 10 : index
    %85 = memref.load %arg1[%c10] : memref<16xi32, #tpu.memory_space<smem>>
    %c10_i32 = arith.constant 10 : i32
    %86 = vector.broadcast %c10_i32 : i32 to vector<16x1xi32>
    %87 = arith.cmpi eq, %0, %86 : vector<16x1xi32>
    %88 = vector.broadcast %85 : i32 to vector<16x1xi32>
    %89 = arith.select %87, %88, %80 : vector<16x1xi1>, vector<16x1xi32>
    %c9_i32_9 = arith.constant 9 : i32
    %90 = vector.broadcast %c9_i32_9 : i32 to vector<16x1xi32>
    %91 = arith.cmpi eq, %0, %90 : vector<16x1xi32>
    %92 = vector.broadcast %85 : i32 to vector<16x1xi32>
    %93 = arith.select %91, %92, %84 : vector<16x1xi1>, vector<16x1xi32>
    %c11 = arith.constant 11 : index
    %94 = memref.load %arg1[%c11] : memref<16xi32, #tpu.memory_space<smem>>
    %c11_i32 = arith.constant 11 : i32
    %95 = vector.broadcast %c11_i32 : i32 to vector<16x1xi32>
    %96 = arith.cmpi eq, %0, %95 : vector<16x1xi32>
    %97 = vector.broadcast %94 : i32 to vector<16x1xi32>
    %98 = arith.select %96, %97, %89 : vector<16x1xi1>, vector<16x1xi32>
    %c10_i32_10 = arith.constant 10 : i32
    %99 = vector.broadcast %c10_i32_10 : i32 to vector<16x1xi32>
    %100 = arith.cmpi eq, %0, %99 : vector<16x1xi32>
    %101 = vector.broadcast %94 : i32 to vector<16x1xi32>
    %102 = arith.select %100, %101, %93 : vector<16x1xi1>, vector<16x1xi32>
    %c12 = arith.constant 12 : index
    %103 = memref.load %arg1[%c12] : memref<16xi32, #tpu.memory_space<smem>>
    %c12_i32 = arith.constant 12 : i32
    %104 = vector.broadcast %c12_i32 : i32 to vector<16x1xi32>
    %105 = arith.cmpi eq, %0, %104 : vector<16x1xi32>
    %106 = vector.broadcast %103 : i32 to vector<16x1xi32>
    %107 = arith.select %105, %106, %98 : vector<16x1xi1>, vector<16x1xi32>
    %c11_i32_11 = arith.constant 11 : i32
    %108 = vector.broadcast %c11_i32_11 : i32 to vector<16x1xi32>
    %109 = arith.cmpi eq, %0, %108 : vector<16x1xi32>
    %110 = vector.broadcast %103 : i32 to vector<16x1xi32>
    %111 = arith.select %109, %110, %102 : vector<16x1xi1>, vector<16x1xi32>
    %c13 = arith.constant 13 : index
    %112 = memref.load %arg1[%c13] : memref<16xi32, #tpu.memory_space<smem>>
    %c13_i32 = arith.constant 13 : i32
    %113 = vector.broadcast %c13_i32 : i32 to vector<16x1xi32>
    %114 = arith.cmpi eq, %0, %113 : vector<16x1xi32>
    %115 = vector.broadcast %112 : i32 to vector<16x1xi32>
    %116 = arith.select %114, %115, %107 : vector<16x1xi1>, vector<16x1xi32>
    %c12_i32_12 = arith.constant 12 : i32
    %117 = vector.broadcast %c12_i32_12 : i32 to vector<16x1xi32>
    %118 = arith.cmpi eq, %0, %117 : vector<16x1xi32>
    %119 = vector.broadcast %112 : i32 to vector<16x1xi32>
    %120 = arith.select %118, %119, %111 : vector<16x1xi1>, vector<16x1xi32>
    %c14 = arith.constant 14 : index
    %121 = memref.load %arg1[%c14] : memref<16xi32, #tpu.memory_space<smem>>
    %c14_i32 = arith.constant 14 : i32
    %122 = vector.broadcast %c14_i32 : i32 to vector<16x1xi32>
    %123 = arith.cmpi eq, %0, %122 : vector<16x1xi32>
    %124 = vector.broadcast %121 : i32 to vector<16x1xi32>
    %125 = arith.select %123, %124, %116 : vector<16x1xi1>, vector<16x1xi32>
    %c13_i32_13 = arith.constant 13 : i32
    %126 = vector.broadcast %c13_i32_13 : i32 to vector<16x1xi32>
    %127 = arith.cmpi eq, %0, %126 : vector<16x1xi32>
    %128 = vector.broadcast %121 : i32 to vector<16x1xi32>
    %129 = arith.select %127, %128, %120 : vector<16x1xi1>, vector<16x1xi32>
    %c15 = arith.constant 15 : index
    %130 = memref.load %arg1[%c15] : memref<16xi32, #tpu.memory_space<smem>>
    %c15_i32 = arith.constant 15 : i32
    %131 = vector.broadcast %c15_i32 : i32 to vector<16x1xi32>
    %132 = arith.cmpi eq, %0, %131 : vector<16x1xi32>
    %133 = vector.broadcast %130 : i32 to vector<16x1xi32>
    %134 = arith.select %132, %133, %125 : vector<16x1xi1>, vector<16x1xi32>
    %c14_i32_14 = arith.constant 14 : i32
    %135 = vector.broadcast %c14_i32_14 : i32 to vector<16x1xi32>
    %136 = arith.cmpi eq, %0, %135 : vector<16x1xi32>
    %137 = vector.broadcast %130 : i32 to vector<16x1xi32>
    %138 = arith.select %136, %137, %129 : vector<16x1xi1>, vector<16x1xi32>
    %139 = tpu.iota {dimensions = array<i32: 1>} : vector<16x256xi32>
    %140 = vector.broadcast %134 : vector<16x1xi32> to vector<16x256xi32>
    %141 = arith.cmpi eq, %139, %140 : vector<16x256xi32>
    %142 = arith.extui %141 : vector<16x256xi1> to vector<16x256xi32>
    %143 = arith.sitofp %142 : vector<16x256xi32> to vector<16x256xf32>
    %144 = arith.truncf %143 : vector<16x256xf32> to vector<16x256xbf16>
    %c0_15 = arith.constant 0 : index
    %c0_16 = arith.constant 0 : index
    %145 = vector.load %arg2[%c0_15, %c0_16] : memref<256x64xbf16, #tpu.memory_space<vmem>>, vector<256x64xbf16>
    %cst = arith.constant dense<0.000000e+00> : vector<16x64xf32>
    %146 = tpu.matmul %144, %145, %cst {dimension_numbers = #tpu.dot_dimension_numbers<[1], [0], [0], [1], [0, 0, 1, 1], [], []>} : vector<16x256xbf16>, vector<256x64xbf16>, vector<16x64xf32> -> vector<16x64xf32>
    %147 = arith.truncf %146 : vector<16x64xf32> to vector<16x64xbf16>
    %c0_17 = arith.constant 0 : index
    %c0_18 = arith.constant 0 : index
    %148 = vector.load %arg3[%c0_17, %c0_18] : memref<64x64xbf16, #tpu.memory_space<vmem>>, vector<64x64xbf16>
    %cst_19 = arith.constant dense<0.000000e+00> : vector<16x64xf32>
    %149 = tpu.matmul %147, %148, %cst_19 {dimension_numbers = #tpu.dot_dimension_numbers<[1], [0], [0], [1], [0, 0, 1, 1], [], []>} : vector<16x64xbf16>, vector<64x64xbf16>, vector<16x64xf32> -> vector<16x64xf32>
    %c0_20 = arith.constant 0 : index
    %c0_21 = arith.constant 0 : index
    %150 = vector.load %arg4[%c0_20, %c0_21] : memref<1x64xf32, #tpu.memory_space<vmem>>, vector<1x64xf32>
    %151 = vector.broadcast %150 : vector<1x64xf32> to vector<16x64xf32>
    %152 = arith.addf %149, %151 : vector<16x64xf32>
    %153 = math.tanh %152 : vector<16x64xf32>
    %154 = arith.truncf %153 : vector<16x64xf32> to vector<16x64xbf16>
    %c0_22 = arith.constant 0 : index
    %c0_23 = arith.constant 0 : index
    %155 = vector.load %arg5[%c0_22, %c0_23] : memref<64x256xbf16, #tpu.memory_space<vmem>>, vector<64x256xbf16>
    %cst_24 = arith.constant dense<0.000000e+00> : vector<16x256xf32>
    %156 = tpu.matmul %154, %155, %cst_24 {dimension_numbers = #tpu.dot_dimension_numbers<[1], [0], [0], [1], [0, 0, 1, 1], [], []>} : vector<16x64xbf16>, vector<64x256xbf16>, vector<16x256xf32> -> vector<16x256xf32>
    %c0_25 = arith.constant 0 : index
    %c0_26 = arith.constant 0 : index
    %157 = vector.load %arg6[%c0_25, %c0_26] : memref<16x256xf32, #tpu.memory_space<vmem>>, vector<16x256xf32>
    tpu.vector_store %arg6[%c0_25, %c0_26], %156 {strides = array<i32>} : memref<16x256xf32, #tpu.memory_space<vmem>>, vector<16x256xf32>,
    %cst_27 = arith.constant dense<0xFF800000> : vector<16xf32>
    %158 = vector.multi_reduction <maximumf>, %156, %cst_27 [1] : vector<16x256xf32> to vector<16xf32>
    %159 = vector.shape_cast %158 : vector<16xf32> to vector<16x1xf32>
    %160 = vector.broadcast %159 : vector<16x1xf32> to vector<16x256xf32>
    %161 = arith.subf %156, %160 : vector<16x256xf32>
    %162 = math.exp %161 : vector<16x256xf32>
    %cst_28 = arith.constant dense<0.000000e+00> : vector<16xf32>
    %163 = vector.multi_reduction <add>, %162, %cst_28 [1] : vector<16x256xf32> to vector<16xf32>
    %164 = vector.shape_cast %163 : vector<16xf32> to vector<16x1xf32>
    %165 = math.log %164 : vector<16x1xf32>
    %166 = arith.addf %159, %165 : vector<16x1xf32>
    %167 = vector.broadcast %138 : vector<16x1xi32> to vector<16x256xi32>
    %168 = arith.cmpi eq, %139, %167 : vector<16x256xi32>
    %cst_29 = arith.constant 0.000000e+00 : f32
    %169 = vector.broadcast %cst_29 : f32 to vector<16x256xf32>
    %170 = arith.select %168, %156, %169 : vector<16x256xi1>, vector<16x256xf32>
    %cst_30 = arith.constant dense<0.000000e+00> : vector<16xf32>
    %171 = vector.multi_reduction <add>, %170, %cst_30 [1] : vector<16x256xf32> to vector<16xf32>
    %172 = vector.shape_cast %171 : vector<16xf32> to vector<16x1xf32>
    %173 = arith.extui %168 : vector<16x256xi1> to vector<16x256xi32>
    %174 = arith.sitofp %173 : vector<16x256xi32> to vector<16x256xf32>
    %cst_31 = arith.constant dense<0.000000e+00> : vector<16xf32>
    %175 = vector.multi_reduction <add>, %174, %cst_31 [1] : vector<16x256xf32> to vector<16xf32>
    %176 = vector.shape_cast %175 : vector<16xf32> to vector<16x1xf32>
    %177 = arith.subf %166, %172 : vector<16x1xf32>
    %178 = arith.mulf %176, %177 : vector<16x1xf32>
    %cst_32 = arith.constant dense<0.000000e+00> : vector<1xf32>
    %179 = vector.multi_reduction <add>, %178, %cst_32 [0] : vector<16x1xf32> to vector<1xf32>
    %180 = vector.shape_cast %179 : vector<1xf32> to vector<1x1xf32>
    %cst_33 = arith.constant 0.0714285746 : f32
    %181 = vector.broadcast %cst_33 : f32 to vector<1x1xf32>
    %182 = arith.mulf %180, %181 : vector<1x1xf32>
    %183 = vector.shape_cast %182 : vector<1x1xf32> to vector<1x1xf32>
    %184 = vector.broadcast %183 : vector<1x1xf32> to vector<1x128xf32>
    %c0_34 = arith.constant 0 : index
    %c0_35 = arith.constant 0 : index
    %185 = vector.load %arg7[%c0_34, %c0_35] : memref<1x128xf32, #tpu.memory_space<vmem>>, vector<1x128xf32>
    tpu.vector_store %arg7[%c0_34, %c0_35], %184 {strides = array<i32>} : memref<1x128xf32, #tpu.memory_space<vmem>>, vector<1x128xf32>,
    return
  }
  func.func @transform_0(%arg0: i32, %arg1: memref<16xi32, #tpu.memory_space<smem>>) -> (i32, i32) {
    %c0_i32 = arith.constant 0 : i32
    %c0_i32_0 = arith.constant 0 : i32
    %c0_i32_1 = arith.constant 0 : i32
    return %c0_i32, %c0_i32_0 : i32, i32
  }
  func.func @transform_1(%arg0: i32, %arg1: memref<16xi32, #tpu.memory_space<smem>>) -> (i32, i32) {
    %c0_i32 = arith.constant 0 : i32
    %c0_i32_0 = arith.constant 0 : i32
    %c0_i32_1 = arith.constant 0 : i32
    return %c0_i32, %c0_i32_0 : i32, i32
  }
  func.func @transform_2(%arg0: i32, %arg1: memref<16xi32, #tpu.memory_space<smem>>) -> (i32, i32) {
    %c0_i32 = arith.constant 0 : i32
    %c0_i32_0 = arith.constant 0 : i32
    %c0_i32_1 = arith.constant 0 : i32
    return %c0_i32, %c0_i32_0 : i32, i32
  }
  func.func @transform_3(%arg0: i32, %arg1: memref<16xi32, #tpu.memory_space<smem>>) -> (i32, i32) {
    %c0_i32 = arith.constant 0 : i32
    %c0_i32_0 = arith.constant 0 : i32
    %c0_i32_1 = arith.constant 0 : i32
    return %c0_i32, %c0_i32_0 : i32, i32
  }
  func.func @transform_4(%arg0: i32, %arg1: memref<16xi32, #tpu.memory_space<smem>>) -> (i32, i32) {
    %c0_i32 = arith.constant 0 : i32
    %c0_i32_0 = arith.constant 0 : i32
    %c0_i32_1 = arith.constant 0 : i32
    return %c0_i32, %c0_i32_0 : i32, i32
  }
  func.func @transform_5(%arg0: i32, %arg1: memref<16xi32, #tpu.memory_space<smem>>) -> (i32, i32) {
    %c0_i32 = arith.constant 0 : i32
    %c0_i32_0 = arith.constant 0 : i32
    %c0_i32_1 = arith.constant 0 : i32
    return %c0_i32, %c0_i32_0 : i32, i32
  }
}

</mosaic_0001>

<llo_original>
// kernel: server_forward.1
$region0: #{server_forward.1}
  #allocation0 [shape = 'u32[]', space=smem, size = 0x4, offset = 0x4, fixed_abs, tag = 'smem constant byte address 0x4 - core index']
  #allocation1 [shape = 'u32[144,128]{1,0:T(1,128)}', space=vmem, size = 0x12000, scoped, tag = 'internal scratch']
  #allocation2 [shape = 's32[1]{0}', space=sflag, size = 0x4, scoped, tag = 'scoped memory for server_forward.1']
  #allocation3 [shape = 'u8[512]{0}', space=smem, size = 0x200, scoped, tag = 'prefetched SMEM operand 0']
  %s0 = inlined_call_operand.vmem [shape: s32[16], index: 0, kind: input, shape index: {}]
  %s1 = inlined_call_operand.vmem [shape: bf16[256,64], index: 1, kind: input, shape index: {}]
  %s2 = inlined_call_operand.vmem [shape: bf16[64,64], index: 2, kind: input, shape index: {}]
  %s3 = inlined_call_operand.vmem [shape: f32[1,64], index: 3, kind: input, shape index: {}]
  %s4 = inlined_call_operand.vmem [shape: bf16[64,256], index: 4, kind: input, shape index: {}]
  %s5 = inlined_call_operand.hbm [shape: f32[16,256], index: 5, kind: output, shape index: {0}]
  %s6 = inlined_call_operand.hbm [shape: f32[1,128], index: 6, kind: output, shape index: {1}]
  %7 = xla_tuple %s5, %s6
  %s8 = sld [smem:[#allocation0]]
  $region34: #{server_forward.1} parent=0
    _
  %s10 = ssub.s32 1, %s8
  %s11 = scalar_select 0, %s10, %s8
  %s12 = sshll.u32 %s0, 4
  %s13 = int_to_ptr.vmem [resolvable:$true] %s12
  %15 = dma.vmem_to_smem %s13, 16, [#allocation3], [#allocation2]
  %16 = dma.done [#allocation2], 16
  %17 = sfence
  $region1: #{server_forward.1} parent=0
    #allocation4 [shape = 'u8[16384]{0}', space=vmem, size = 0x4000, scoped, tag = 'output window, operand 0, single buffered']
    #allocation5 [shape = 's32[1]{0}', space=sflag, size = 0x4, scoped, tag = 'scoped memory for server_forward.1']
    #allocation6 [shape = 'u8[512]{0}', space=vmem, size = 0x400, scoped, tag = 'output window, operand 1, single buffered']
    #allocation7 [shape = 's32[1]{0}', space=sflag, size = 0x4, scoped, tag = 'scoped memory for server_forward.1']
    %18 = vsyncpa [#allocation5], 0
    %19 = vsyncpa [#allocation7], 0
    // Predicated region
    $region2: #{server_forward.1} parent=1 // pred_check
      _
    $region3: #{server_forward.1} parent=1 // pred_check_branch
      %21 = sbr.rel (0) target = $region5
    $region4: #{server_forward.1} parent=1 // pred_region
      _
    $region5: #{server_forward.1} parent=1 // pred_fallthru
      _
    // Predicated region
    $region6: #{server_forward.1} parent=1 // pred_check
      _
    $region7: #{server_forward.1} parent=1 // pred_check_branch
      %23 = sbr.rel (0) target = $region9
    $region8: #{server_forward.1} parent=1 // pred_region
      _
    $region9: #{server_forward.1} parent=1 // pred_fallthru
      _
    // Predicated region
    $region10: #{server_forward.1} parent=1 // pred_check
      _
    $region11: #{server_forward.1} parent=1 // pred_check_branch
      %25 = sbr.rel (0) target = $region13
    $region12: #{server_forward.1} parent=1 // pred_region
      _
    $region13: #{server_forward.1} parent=1 // pred_fallthru
      _
    // Predicated region
    $region14: #{server_forward.1} parent=1 // pred_check
      _
    $region15: #{server_forward.1} parent=1 // pred_check_branch
      %27 = sbr.rel (0) target = $region17
    $region16: #{server_forward.1} parent=1 // pred_region
      _
    $region17: #{server_forward.1} parent=1 // pred_fallthru
      _
    %v29 = vlaneseq
    %v30 = vshrl.u32 %v29, 7
    %v31 = vadd.s32 %v30, 8
    %s32 = sld [smem:[#allocation3]]
    %vm33 = vcmp.eq.s32.totalorder %v30, 0
    %vm34 = vcmp.eq.s32.totalorder %v31, 0
    %v35 = vstv %s32
    %v36 = vsel %vm33, %v35, 0
    %v37 = vsel %vm34, %v35, 0
    %s38 = sld [smem:[#allocation3 + $0x1]]
    %vm39 = vcmp.eq.s32.totalorder %v30, 1
    %vm40 = vcmp.eq.s32.totalorder %v31, 1
    %v41 = vstv %s38
    %v42 = vsel %vm39, %v41, %v36
    %v43 = vsel %vm40, %v41, %v37
    %v44 = vsel %vm33, %v41, 4294967295
    %v45 = vsel %vm34, %v41, 4294967295
    %s46 = sld [smem:[#allocation3 + $0x2]]
    %vm47 = vcmp.eq.s32.totalorder %v30, 2
    %vm48 = vcmp.eq.s32.totalorder %v31, 2
    %v49 = vstv %s46
    %v50 = vsel %vm47, %v49, %v42
    %v51 = vsel %vm48, %v49, %v43
    %v52 = vsel %vm39, %v49, %v44
    %v53 = vsel %vm40, %v49, %v45
    %s54 = sld [smem:[#allocation3 + $0x3]]
    %vm55 = vcmp.eq.s32.totalorder %v30, 3
    %vm56 = vcmp.eq.s32.totalorder %v31, 3
    %v57 = vstv %s54
    %v58 = vsel %vm55, %v57, %v50
    %v59 = vsel %vm56, %v57, %v51
    %v60 = vsel %vm47, %v57, %v52
    %v61 = vsel %vm48, %v57, %v53
    %s62 = sld [smem:[#allocation3 + $0x4]]
    %vm63 = vcmp.eq.s32.totalorder %v30, 4
    %vm64 = vcmp.eq.s32.totalorder %v31, 4
    %v65 = vstv %s62
    %v66 = vsel %vm63, %v65, %v58
    %v67 = vsel %vm64, %v65, %v59
    %v68 = vsel %vm55, %v65, %v60
    %v69 = vsel %vm56, %v65, %v61
    %s70 = sld [smem:[#allocation3 + $0x5]]
    %vm71 = vcmp.eq.s32.totalorder %v30, 5
    %vm72 = vcmp.eq.s32.totalorder %v31, 5
    %v73 = vstv %s70
    %v74 = vsel %vm71, %v73, %v66
    %v75 = vsel %vm72, %v73, %v67
    %v76 = vsel %vm63, %v73, %v68
    %v77 = vsel %vm64, %v73, %v69
    %s78 = sld [smem:[#allocation3 + $0x6]]
    %vm79 = vcmp.eq.s32.totalorder %v30, 6
    %vm80 = vcmp.eq.s32.totalorder %v31, 6
    %v81 = vstv %s78
    %v82 = vsel %vm79, %v81, %v74
    %v83 = vsel %vm80, %v81, %v75
    %v84 = vsel %vm71, %v81, %v76
    %v85 = vsel %vm72, %v81, %v77
    %s86 = sld [smem:[#allocation3 + $0x7]]
    %vm87 = vcmp.eq.s32.totalorder %v30, 7
    %vm88 = vcmp.eq.s32.totalorder %v31, 7
    %v89 = vstv %s86
    %v90 = vsel %vm87, %v89, %v82
    %v91 = vsel %vm88, %v89, %v83
    %v92 = vsel %vm79, %v89, %v84
    %v93 = vsel %vm80, %v89, %v85
    %s94 = sld [smem:[#allocation3 + $0x8]]
    %vm95 = vcmp.eq.s32.totalorder %v30, 8
    %vm96 = vcmp.eq.s32.totalorder %v31, 8
    %v97 = vstv %s94
    %v98 = vsel %vm95, %v97, %v90
    %v99 = vsel %vm96, %v97, %v91
    %s100 = sld [smem:[#allocation3 + $0x9]]
    %vm101 = vcmp.eq.s32.totalorder %v30, 9
    %vm102 = vcmp.eq.s32.totalorder %v31, 9
    %v103 = vstv %s100
    %v104 = vsel %vm101, %v103, %v98
    %v105 = vsel %vm102, %v103, %v99
    %v106 = vsel %vm95, %v103, %v92
    %v107 = vsel %vm96, %v103, %v93
    %s108 = sld [smem:[#allocation3 + $0xa]]
    %vm109 = vcmp.eq.s32.totalorder %v30, 10
    %vm110 = vcmp.eq.s32.totalorder %v31, 10
    %v111 = vstv %s108
    %v112 = vsel %vm109, %v111, %v104
    %v113 = vsel %vm110, %v111, %v105
    %v114 = vsel %vm101, %v111, %v106
    %v115 = vsel %vm102, %v111, %v107
    %s116 = sld [smem:[#allocation3 + $0xb]]
    %vm117 = vcmp.eq.s32.totalorder %v30, 11
    %vm118 = vcmp.eq.s32.totalorder %v31, 11
    %v119 = vstv %s116
    %v120 = vsel %vm117, %v119, %v112
    %v121 = vsel %vm118, %v119, %v113
    %v122 = vsel %vm109, %v119, %v114
    %v123 = vsel %vm110, %v119, %v115
    %s124 = sld [smem:[#allocation3 + $0xc]]
    %vm125 = vcmp.eq.s32.totalorder %v30, 12
    %vm126 = vcmp.eq.s32.totalorder %v31, 12
    %v127 = vstv %s124
    %v128 = vsel %vm125, %v127, %v120
    %v129 = vsel %vm126, %v127, %v121
    %v130 = vsel %vm117, %v127, %v122
    %v131 = vsel %vm118, %v127, %v123
    %s132 = sld [smem:[#allocation3 + $0xd]]
    %vm133 = vcmp.eq.s32.totalorder %v30, 13
    %vm134 = vcmp.eq.s32.totalorder %v31, 13
    %v135 = vstv %s132
    %v136 = vsel %vm133, %v135, %v128
    %v137 = vsel %vm134, %v135, %v129
    %v138 = vsel %vm125, %v135, %v130
    %v139 = vsel %vm126, %v135, %v131
    %s140 = sld [smem:[#allocation3 + $0xe]]
    %vm141 = vcmp.eq.s32.totalorder %v30, 14
    %vm142 = vcmp.eq.s32.totalorder %v31, 14
    %v143 = vstv %s140
    %v144 = vsel %vm141, %v143, %v136
    %v145 = vsel %vm142, %v143, %v137
    %v146 = vsel %vm133, %v143, %v138
    %v147 = vsel %vm134, %v143, %v139
    %s148 = sld [smem:[#allocation3 + $0xf]]
    %vm149 = vcmp.eq.s32.totalorder %v30, 15
    %vm150 = vcmp.eq.s32.totalorder %v31, 15
    %v151 = vstv %s148
    %v152 = vsel %vm149, %v151, %v144
    %v153 = vsel %vm150, %v151, %v145
    %v154 = vsel %vm141, %v151, %v146
    %v155 = vsel %vm142, %v151, %v147
    %v156 = vlaneseq
    %v157 = vand.u32 %v156, 127
    %v158 = vadd.s32 %v157, 128
    %vm159 = vcmp.eq.s32.totalorder %v157, %v152
    %vm160 = vcmp.eq.s32.totalorder %v158, %v152
    %vm161 = vcmp.eq.s32.totalorder %v157, %v153
    %vm162 = vcmp.eq.s32.totalorder %v158, %v153
    %v163 = vsel %vm159, 1, 0
    %v164 = vsel %vm160, 1, 0
    %v165 = vsel %vm161, 1, 0
    %v166 = vsel %vm162, 1, 0
    %v167 = vcvt.s32.f32 %v163
    %v168 = vcvt.s32.f32 %v164
    %v169 = vcvt.s32.f32 %v165
    %v170 = vcvt.s32.f32 %v166
    %v171 = vpack.c.bf16 %v169, %v167
    %v172 = vpack.c.bf16 %v170, %v168
    %v173 = vld [vmem:[%s1] sm:$0xf]
    %v174 = vld [vmem:[%s1 + $0x4] sm:$0xf]
    %v175 = vld [vmem:[%s1 + $0x8] sm:$0xf]
    %v176 = vld [vmem:[%s1 + $0xc] sm:$0xf]
    %v177 = vld [vmem:[%s1 + $0x10] sm:$0xf]
    %v178 = vld [vmem:[%s1 + $0x14] sm:$0xf]
    %v179 = vld [vmem:[%s1 + $0x18] sm:$0xf]
    %v180 = vld [vmem:[%s1 + $0x1c] sm:$0xf]
    %v181 = vld [vmem:[%s1 + $0x20] sm:$0xf]
    %v182 = vld [vmem:[%s1 + $0x24] sm:$0xf]
    %v183 = vld [vmem:[%s1 + $0x28] sm:$0xf]
    %v184 = vld [vmem:[%s1 + $0x2c] sm:$0xf]
    %v185 = vld [vmem:[%s1 + $0x30] sm:$0xf]
    %v186 = vld [vmem:[%s1 + $0x34] sm:$0xf]
    %v187 = vld [vmem:[%s1 + $0x38] sm:$0xf]
    %v188 = vld [vmem:[%s1 + $0x3c] sm:$0xf]
    %v189 = vld [vmem:[%s1 + $0x40] sm:$0xf]
    %v190 = vld [vmem:[%s1 + $0x44] sm:$0xf]
    %v191 = vld [vmem:[%s1 + $0x48] sm:$0xf]
    %v192 = vld [vmem:[%s1 + $0x4c] sm:$0xf]
    %v193 = vld [vmem:[%s1 + $0x50] sm:$0xf]
    %v194 = vld [vmem:[%s1 + $0x54] sm:$0xf]
    %v195 = vld [vmem:[%s1 + $0x58] sm:$0xf]
    %v196 = vld [vmem:[%s1 + $0x5c] sm:$0xf]
    %v197 = vld [vmem:[%s1 + $0x60] sm:$0xf]
    %v198 = vld [vmem:[%s1 + $0x64] sm:$0xf]
    %v199 = vld [vmem:[%s1 + $0x68] sm:$0xf]
    %v200 = vld [vmem:[%s1 + $0x6c] sm:$0xf]
    %v201 = vld [vmem:[%s1 + $0x70] sm:$0xf]
    %v202 = vld [vmem:[%s1 + $0x74] sm:$0xf]
    %v203 = vld [vmem:[%s1 + $0x78] sm:$0xf]
    %v204 = vld [vmem:[%s1 + $0x7c] sm:$0xf]
    %v237 = vunpack.c.l.b16 %v173
    %v238 = vunpack.c.l.b16 %v174
    %v239 = vunpack.c.l.b16 %v175
    %v240 = vunpack.c.l.b16 %v176
    %v241 = vunpack.c.l.b16 %v177
    %v242 = vunpack.c.l.b16 %v178
    %v243 = vunpack.c.l.b16 %v179
    %v244 = vunpack.c.l.b16 %v180
    %v245 = vunpack.c.l.b16 %v181
    %v246 = vunpack.c.l.b16 %v182
    %v247 = vunpack.c.l.b16 %v183
    %v248 = vunpack.c.l.b16 %v184
    %v249 = vunpack.c.l.b16 %v185
    %v250 = vunpack.c.l.b16 %v186
    %v251 = vunpack.c.l.b16 %v187
    %v252 = vunpack.c.l.b16 %v188
    %v253 = vunpack.c.l.b16 %v189
    %v254 = vunpack.c.l.b16 %v190
    %v255 = vunpack.c.l.b16 %v191
    %v256 = vunpack.c.l.b16 %v192
    %v257 = vunpack.c.l.b16 %v193
    %v258 = vunpack.c.l.b16 %v194
    %v259 = vunpack.c.l.b16 %v195
    %v260 = vunpack.c.l.b16 %v196
    %v261 = vunpack.c.l.b16 %v197
    %v262 = vunpack.c.l.b16 %v198
    %v263 = vunpack.c.l.b16 %v199
    %v264 = vunpack.c.l.b16 %v200
    %v265 = vunpack.c.l.b16 %v201
    %v266 = vunpack.c.l.b16 %v202
    %v267 = vunpack.c.l.b16 %v203
    %v268 = vunpack.c.l.b16 %v204
    %v269 = vpack.c.b16 %v238, %v237
    %v270 = vpack.c.b16 %v240, %v239
    %v271 = vpack.c.b16 %v242, %v241
    %v272 = vpack.c.b16 %v244, %v243
    %v273 = vpack.c.b16 %v246, %v245
    %v274 = vpack.c.b16 %v248, %v247
    %v275 = vpack.c.b16 %v250, %v249
    %v276 = vpack.c.b16 %v252, %v251
    %v277 = vpack.c.b16 %v254, %v253
    %v278 = vpack.c.b16 %v256, %v255
    %v279 = vpack.c.b16 %v258, %v257
    %v280 = vpack.c.b16 %v260, %v259
    %v281 = vpack.c.b16 %v262, %v261
    %v282 = vpack.c.b16 %v264, %v263
    %v283 = vpack.c.b16 %v266, %v265
    %v284 = vpack.c.b16 %v268, %v267
    %301 = vmatprep.subr.bf16.mxu0 0
    %302 = vmatpush1.bf16.msra.mxu0 %v276
    %303 = vmatprep.subr.bf16.mxu0 0
    %304 = vmatpush1.bf16.msra.mxu0 %v275
    %305 = vmatprep.subr.bf16.mxu0 0
    %306 = vmatpush1.bf16.msra.mxu0 %v274
    %307 = vmatprep.subr.bf16.mxu0 0
    %308 = vmatpush1.bf16.msra.mxu0 %v273
    %309 = vmatprep.subr.bf16.mxu0 0
    %310 = vmatpush1.bf16.msra.mxu0 %v272
    %311 = vmatprep.subr.bf16.mxu0 0
    %312 = vmatpush1.bf16.msra.mxu0 %v271
    %313 = vmatprep.subr.bf16.mxu0 0
    %314 = vmatpush1.bf16.msra.mxu0 %v270
    %315 = vmatprep.subr.bf16.mxu0 0
    %316 = vmatpush1.bf16.msra.mxu0 %v269
    %317 = vmatprep.subr.bf16.mxu0 0
    %318 = vmatpush2.bf16.msra.mxu0 %v284
    %319 = vmatprep.subr.bf16.mxu0 0
    %320 = vmatpush2.bf16.msra.mxu0 %v283
    %321 = vmatprep.subr.bf16.mxu0 0
    %322 = vmatpush2.bf16.msra.mxu0 %v282
    %323 = vmatprep.subr.bf16.mxu0 0
    %324 = vmatpush2.bf16.msra.mxu0 %v281
    %325 = vmatprep.subr.bf16.mxu0 0
    %326 = vmatpush2.bf16.msra.mxu0 %v280
    %327 = vmatprep.subr.bf16.mxu0 0
    %328 = vmatpush2.bf16.msra.mxu0 %v279
    %329 = vmatprep.subr.bf16.mxu0 0
    %330 = vmatpush2.bf16.msra.mxu0 %v278
    %331 = vmatprep.subr.bf16.mxu0 0
    %332 = vmatpush2.bf16.msra.mxu0 %v277
    %333 = vmatprep.mubr.bf16.mxu0 %v172
    %334 = vmatmul.mubr.bf16.gmra.mxu0 %v171
    %v335 = vpop.f32.mrf.mxu0
    %v336 = vadd.f32 0.0, %v335
    %v337 = vpop.f32.mrf.mxu0
    %v338 = vpop.f32.mrf.mxu0
    %v339 = vadd.f32 0.0, %v338
    %v340 = vpop.f32.mrf.mxu0
    %341 = vdwg.mxu0
    %v342 = vpack.c.bf16 %v339, %v336
    %v343 = vld [vmem:[%s2] sm:$0xf]
    %v344 = vld [vmem:[%s2 + $0x4] sm:$0xf]
    %v345 = vld [vmem:[%s2 + $0x8] sm:$0xf]
    %v346 = vld [vmem:[%s2 + $0xc] sm:$0xf]
    %v347 = vld [vmem:[%s2 + $0x10] sm:$0xf]
    %v348 = vld [vmem:[%s2 + $0x14] sm:$0xf]
    %v349 = vld [vmem:[%s2 + $0x18] sm:$0xf]
    %v350 = vld [vmem:[%s2 + $0x1c] sm:$0xf]
    %v351 = vld [vmem:[%s3] sm:$0x1]
    %v353 = vlaneseq
    %v354 = vshrl.u32 %v353, 7
    %v355 = vsub.s32 0, %v354
    %v356 = vrot.slane %v351, %v355
    %v366 = vunpack.c.l.b16 %v343
    %v367 = vunpack.c.l.b16 %v344
    %v368 = vunpack.c.l.b16 %v345
    %v369 = vunpack.c.l.b16 %v346
    %v370 = vunpack.c.l.b16 %v347
    %v371 = vunpack.c.l.b16 %v348
    %v372 = vunpack.c.l.b16 %v349
    %v373 = vunpack.c.l.b16 %v350
    %v374 = vpack.c.b16 %v367, %v366
    %v375 = vpack.c.b16 %v369, %v368
    %v376 = vpack.c.b16 %v371, %v370
    %v377 = vpack.c.b16 %v373, %v372
    %vm382 = vcmask 523264
    %v384 = vsel %vm382, %v342, 0
    %386 = vmatprep.subr.bf16.mxu0 0
    %387 = vmatpush1.bf16.msra.mxu0 0
    %388 = vmatprep.subr.bf16.mxu0 0
    %389 = vmatpush1.bf16.msra.mxu0 0
    %390 = vmatprep.subr.bf16.mxu0 0
    %391 = vmatpush1.bf16.msra.mxu0 0
    %392 = vmatprep.subr.bf16.mxu0 0
    %393 = vmatpush1.bf16.msra.mxu0 0
    %394 = vmatprep.subr.bf16.mxu0 0
    %395 = vmatpush1.bf16.msra.mxu0 %v377
    %396 = vmatprep.subr.bf16.mxu0 0
    %397 = vmatpush1.bf16.msra.mxu0 %v376
    %398 = vmatprep.subr.bf16.mxu0 0
    %399 = vmatpush1.bf16.msra.mxu0 %v375
    %400 = vmatprep.subr.bf16.mxu0 0
    %401 = vmatpush1.bf16.msra.mxu0 %v374
    %402 = vmatprep.subr.bf16.mxu0 0
    %403 = vmatpush2.bf16.msra.mxu0 0
    %404 = vmatprep.subr.bf16.mxu0 0
    %405 = vmatpush2.bf16.msra.mxu0 0
    %406 = vmatprep.subr.bf16.mxu0 0
    %407 = vmatpush2.bf16.msra.mxu0 0
    %408 = vmatprep.subr.bf16.mxu0 0
    %409 = vmatpush2.bf16.msra.mxu0 0
    %410 = vmatprep.subr.bf16.mxu0 0
    %411 = vmatpush2.bf16.msra.mxu0 0
    %412 = vmatprep.subr.bf16.mxu0 0
    %413 = vmatpush2.bf16.msra.mxu0 0
    %414 = vmatprep.subr.bf16.mxu0 0
    %415 = vmatpush2.bf16.msra.mxu0 0
    %416 = vmatprep.subr.bf16.mxu0 0
    %417 = vmatpush2.bf16.msra.mxu0 0
    %418 = vmatprep.mubr.bf16.mxu0 0
    %419 = vmatmul.mubr.bf16.gmra.mxu0 %v384
    %v420 = vpop.f32.mrf.mxu0
    %v421 = vadd.f32 %v356, %v420
    %v422 = vpop.f32.mrf.mxu0
    %v423 = vpop.f32.mrf.mxu0
    %v424 = vadd.f32 %v356, %v423
    %v425 = vpop.f32.mrf.mxu0
    %426 = vdwg.mxu0
    %v427 = vtanh.pop %v421
    %v428 = vtanh.pop %v424
    %v429 = vpack.c.bf16 %v428, %v427
    %v430 = vld [vmem:[%s4] sm:$0xff]
    %v431 = vld [vmem:[%s4 + $0x8] sm:$0xff]
    %v432 = vld [vmem:[%s4 + $0x10] sm:$0xff]
    %v433 = vld [vmem:[%s4 + $0x18] sm:$0xff]
    %v434 = vld [vmem:[%s4 + $0x20] sm:$0xff]
    %v435 = vld [vmem:[%s4 + $0x28] sm:$0xff]
    %v436 = vld [vmem:[%s4 + $0x30] sm:$0xff]
    %v437 = vld [vmem:[%s4 + $0x38] sm:$0xff]
    %v446 = vunpack.c.l.b16 %v430
    %v447 = vunpack.c.h.b16 %v430
    %v448 = vunpack.c.l.b16 %v431
    %v449 = vunpack.c.h.b16 %v431
    %v450 = vunpack.c.l.b16 %v432
    %v451 = vunpack.c.h.b16 %v432
    %v452 = vunpack.c.l.b16 %v433
    %v453 = vunpack.c.h.b16 %v433
    %v454 = vunpack.c.l.b16 %v434
    %v455 = vunpack.c.h.b16 %v434
    %v456 = vunpack.c.l.b16 %v435
    %v457 = vunpack.c.h.b16 %v435
    %v458 = vunpack.c.l.b16 %v436
    %v459 = vunpack.c.h.b16 %v436
    %v460 = vunpack.c.l.b16 %v437
    %v461 = vunpack.c.h.b16 %v437
    %v462 = vpack.c.b16 %v448, %v446
    %v463 = vpack.c.b16 %v449, %v447
    %v464 = vpack.c.b16 %v452, %v450
    %v465 = vpack.c.b16 %v453, %v451
    %v466 = vpack.c.b16 %v456, %v454
    %v467 = vpack.c.b16 %v457, %v455
    %v468 = vpack.c.b16 %v460, %v458
    %v469 = vpack.c.b16 %v461, %v459
    %v479 = vsel %vm382, %v429, 0
    %481 = vmatprep.subr.bf16.mxu0 0
    %482 = vmatpush1.bf16.msra.mxu0 0
    %483 = vmatprep.subr.bf16.mxu0 0
    %484 = vmatpush1.bf16.msra.mxu0 0
    %485 = vmatprep.subr.bf16.mxu0 0
    %486 = vmatpush1.bf16.msra.mxu0 0
    %487 = vmatprep.subr.bf16.mxu0 0
    %488 = vmatpush1.bf16.msra.mxu0 0
    %489 = vmatprep.subr.bf16.mxu0 %v469
    %490 = vmatpush1.bf16.msra.mxu0 %v468
    %491 = vmatprep.subr.bf16.mxu0 %v467
    %492 = vmatpush1.bf16.msra.mxu0 %v466
    %493 = vmatprep.subr.bf16.mxu0 %v465
    %494 = vmatpush1.bf16.msra.mxu0 %v464
    %495 = vmatprep.subr.bf16.mxu0 %v463
    %496 = vmatpush1.bf16.msra.mxu0 %v462
    %497 = vmatprep.subr.bf16.mxu0 0
    %498 = vmatpush2.bf16.msra.mxu0 0
    %499 = vmatprep.subr.bf16.mxu0 0
    %500 = vmatpush2.bf16.msra.mxu0 0
    %501 = vmatprep.subr.bf16.mxu0 0
    %502 = vmatpush2.bf16.msra.mxu0 0
    %503 = vmatprep.subr.bf16.mxu0 0
    %504 = vmatpush2.bf16.msra.mxu0 0
    %505 = vmatprep.subr.bf16.mxu0 0
    %506 = vmatpush2.bf16.msra.mxu0 0
    %507 = vmatprep.subr.bf16.mxu0 0
    %508 = vmatpush2.bf16.msra.mxu0 0
    %509 = vmatprep.subr.bf16.mxu0 0
    %510 = vmatpush2.bf16.msra.mxu0 0
    %511 = vmatprep.subr.bf16.mxu0 0
    %512 = vmatpush2.bf16.msra.mxu0 0
    %513 = vmatprep.mubr.bf16.mxu0 0
    %514 = vmatmul.mubr.bf16.gmra.mxu0 %v479
    %v515 = vpop.f32.mrf.mxu0
    %v516 = vadd.f32 0.0, %v515
    %v517 = vpop.f32.mrf.mxu0
    %v518 = vadd.f32 0.0, %v517
    %v519 = vpop.f32.mrf.mxu0
    %v520 = vadd.f32 0.0, %v519
    %v521 = vpop.f32.mrf.mxu0
    %v522 = vadd.f32 0.0, %v521
    %523 = vdwg.mxu0
    %524 = vst [vmem:[#allocation4] sm:$0xff] %v516
    %525 = vst [vmem:[#allocation4 + $0x8] sm:$0xff] %v518
    %526 = vst [vmem:[#allocation4 + $0x10] sm:$0xff] %v520
    %527 = vst [vmem:[#allocation4 + $0x18] sm:$0xff] %v522
    %v528 = vmax.f32 %v516, %v518
    %529 = vmax.xlane.f32.xlu0 %v528
    %v530 = vpop.xlane.xlu0 %529
    %v531 = vmax.f32 %v520, %v522
    %532 = vmax.xlane.f32.xlu0 %v531
    %v533 = vpop.xlane.xlu0 %532
    %v534 = vsub.f32 %v516, %v530
    %v535 = vsub.f32 %v518, %v530
    %v536 = vsub.f32 %v520, %v533
    %v537 = vsub.f32 %v522, %v533
    %v538 = vmul.f32 %v534, 1.442695
    %v539 = vpow.pop %v538
    %v540 = vmul.f32 %v535, 1.442695
    %v541 = vpow.pop %v540
    %v542 = vmul.f32 %v536, 1.442695
    %v543 = vpow.pop %v542
    %v544 = vmul.f32 %v537, 1.442695
    %v545 = vpow.pop %v544
    %v546 = vadd.f32 %v539, %v541
    %547 = vadd.xlane.f32.xlu0 %v546
    %v548 = vpop.xlane.xlu0 %547
    %v549 = vadd.f32 %v543, %v545
    %550 = vadd.xlane.f32.xlu0 %v549
    %v551 = vpop.xlane.xlu0 %550
    %v552 = vlog2.pop %v548
    %v553 = vmul.f32 %v552, 0.6931472
    %v554 = vlog2.pop %v551
    %v555 = vmul.f32 %v554, 0.6931472
    %v556 = vadd.f32 %v530, %v553
    %v557 = vadd.f32 %v533, %v555
    %vm558 = vcmp.eq.s32.totalorder %v157, %v154
    %vm559 = vcmp.eq.s32.totalorder %v158, %v154
    %vm560 = vcmp.eq.s32.totalorder %v157, %v155
    %vm561 = vcmp.eq.s32.totalorder %v158, %v155
    %v562 = vsel %vm558, %v516, 0.0
    %v563 = vsel %vm559, %v518, 0.0
    %v564 = vsel %vm560, %v520, 0.0
    %v565 = vsel %vm561, %v522, 0.0
    %v566 = vadd.f32 %v562, %v563
    %567 = vadd.xlane.f32.xlu0 %v566
    %v568 = vpop.xlane.xlu0 %567
    %v569 = vadd.f32 %v564, %v565
    %570 = vadd.xlane.f32.xlu0 %v569
    %v571 = vpop.xlane.xlu0 %570
    %v572 = vsel %vm558, 1, 0
    %v573 = vsel %vm559, 1, 0
    %v574 = vsel %vm560, 1, 0
    %v575 = vsel %vm561, 1, 0
    %v576 = vcvt.s32.f32 %v572
    %v577 = vcvt.s32.f32 %v573
    %v578 = vcvt.s32.f32 %v574
    %v579 = vcvt.s32.f32 %v575
    %v580 = vadd.f32 %v576, %v577
    %581 = vadd.xlane.f32.xlu0 %v580
    %v582 = vpop.xlane.xlu0 %581
    %v583 = vadd.f32 %v578, %v579
    %584 = vadd.xlane.f32.xlu0 %v583
    %v585 = vpop.xlane.xlu0 %584
    %v586 = vsub.f32 %v556, %v568
    %v587 = vsub.f32 %v557, %v571
    %v588 = vmul.f32 %v582, %v586
    %v589 = vmul.f32 %v585, %v587
    %v590 = vadd.f32 %v588, %v589
    %v591 = vrot.slane %v590, 4
    %v592 = vadd.f32 %v590, %v591
    %v593 = vrot.slane %v592, 2
    %v594 = vadd.f32 %v592, %v593
    %v595 = vrot.slane %v594, 1
    %v596 = vadd.f32 %v594, %v595
    %v597 = vmul.f32 %v596, 0.071428575
    %598 = vst [vmem:[#allocation6] sm:$0x1] %v597
    // Predicated region
    $region18: #{server_forward.1} parent=1 // pred_check
      _
    $region19: #{server_forward.1} parent=1 // pred_check_branch
      %600 = sbr.rel (0) target = $region21
    $region20: #{server_forward.1} parent=1 // pred_region
      %s602 = ssub.s32 512, 512
      %603 = vsyncadd [#allocation5], %s602
      %s604 = sshll.u32 [#allocation4], 4
      %s605 = int_to_ptr.vmem [resolvable:$true] %s604
      %610 = dma.vmem_to_hbm [thread:$0]  %s605, 512, %s5, [#allocation5], 256, 256, 16
    $region21: #{server_forward.1} parent=1 // pred_fallthru
      _
    // Predicated region
    $region22: #{server_forward.1} parent=1 // pred_check
      _
    $region23: #{server_forward.1} parent=1 // pred_check_branch
      %612 = sbr.rel (0) target = $region25
    $region24: #{server_forward.1} parent=1 // pred_region
      %s614 = ssub.s32 16, 16
      %615 = vsyncadd [#allocation7], %s614
      %s617 = sshll.u32 [#allocation6], 4
      %s618 = int_to_ptr.vmem [resolvable:$true] %s617
      %620 = dma.vmem_to_hbm [thread:$0]  %s618, 16, %s6, [#allocation7]
    $region25: #{server_forward.1} parent=1 // pred_fallthru
      _
    // Predicated region
    $region26: #{server_forward.1} parent=1 // pred_check
      _
    $region27: #{server_forward.1} parent=1 // pred_check_branch
      %622 = sbr.rel (0) target = $region29
    $region28: #{server_forward.1} parent=1 // pred_region
      %623 = dma.done [#allocation5], 512
    $region29: #{server_forward.1} parent=1 // pred_fallthru
      _
    // Predicated region
    $region30: #{server_forward.1} parent=1 // pred_check
      _
    $region31: #{server_forward.1} parent=1 // pred_check_branch
      %625 = sbr.rel (0) target = $region33
    $region32: #{server_forward.1} parent=1 // pred_region
      %626 = dma.done [#allocation7], 16
    $region33: #{server_forward.1} parent=1 // pred_fallthru
      _
    %627 = vsyncpa [#allocation5], 1
    %628 = vsyncpa [#allocation7], 1

</llo_original>
